<compile_context>
chip_gen: v5e
topology: v5e:2x2
jax: 0.10.0
libtpu: 0.0.40
codegen_flags: <defaults>
</compile_context>

<pallas_src>
import functools

import jax
import jax.numpy as jnp
from jax.experimental import pallas as pl
from jax.experimental.pallas import tpu as pltpu

EPS = 1e-8


# ---------------------------------------------------------------------------
# Per-generation hardware parameters (best effort, trace-time)
# ---------------------------------------------------------------------------
def _tpu_generation():
    """Returns (per-core VMEM bytes, #TensorCores sharing the 'parallel' axis)."""
    kind = ""
    try:
        kind = jax.devices()[0].device_kind.lower()
    except Exception:
        pass
    if "v7" in kind:
        return 64 << 20, 2            # v7x: 64 MiB VMEM per TC, 2 TCs / chip
    if "v5" in kind or "v6" in kind:
        return 128 << 20, 1           # v5e/v6e: 128 MiB VMEM, 1 TC / chip
    try:
        return int(pltpu.get_tpu_info().vmem_capacity_bytes), 1
    except Exception:
        return 64 << 20, 2            # unknown chip: conservative (v7x-like)


# ---------------------------------------------------------------------------
# Per-mode fused kernels (only the refs each mode actually needs are DMA'd)
# ---------------------------------------------------------------------------
def _make_dain_kernel(mode):
    # All kernels are fused: at most two XLU reductions over the (Bblk, C, T)
    # tile plus a single elementwise apply+store pass.  Rows past B in the last
    # (partial) batch block see padded/undefined data; that is safe because all
    # math is row-independent (the (Bblk,C)@(C,C) matmuls never mix batch rows)
    # and out-of-range stores are masked by the pipeliner.
    # TODO(synk): for bf16 inputs on v6e/v7x the final apply/store could run in
    # packed bf16 (reductions stay f32) to halve VALU/vst bytes.

    if mode == "avg":
        def kernel(x_ref, o_ref):
            x = x_ref[...].astype(jnp.float32)
            m = jnp.mean(x, axis=2, keepdims=True)
            o_ref[...] = (x - m).astype(o_ref.dtype)
        return kernel

    if mode == "adaptive_avg":
        def kernel(x_ref, wmT_ref, o_ref):
            x = x_ref[...].astype(jnp.float32)
            avg = jnp.mean(x, axis=2)                                    # (Bblk, C)
            a = jnp.dot(avg, wmT_ref[...], preferred_element_type=jnp.float32)
            o_ref[...] = (x - a[:, :, None]).astype(o_ref.dtype)
        return kernel

    if mode == "adaptive_scale":
        def kernel(x_ref, wmT_ref, wsT_ref, o_ref):
            x = x_ref[...].astype(jnp.float32)
            avg = jnp.mean(x, axis=2)
            a = jnp.dot(avg, wmT_ref[...], preferred_element_type=jnp.float32)
            y = x - a[:, :, None]                                        # centered
            # Centered second moment (two-pass form keeps the 1e-5 tolerance;
            # the one-pass E[x^2]-E[x]^2 form risks f32 cancellation).
            std = jnp.sqrt(jnp.mean(y * y, axis=2) + EPS)                # (Bblk, C)
            astd = jnp.dot(std, wsT_ref[...], preferred_element_type=jnp.float32)
            astd = jnp.where(astd <= EPS, 1.0, astd)
            scale = 1.0 / astd                                           # exact recip
            o_ref[...] = (y * scale[:, :, None]).astype(o_ref.dtype)
        return kernel

    if mode == "full":
        def kernel(x_ref, wmT_ref, wsT_ref, wgT_ref, bg_ref, o_ref):
            x = x_ref[...].astype(jnp.float32)
            avg = jnp.mean(x, axis=2)
            a = jnp.dot(avg, wmT_ref[...], preferred_element_type=jnp.float32)
            y = x - a[:, :, None]                                        # centered
            std = jnp.sqrt(jnp.mean(y * y, axis=2) + EPS)
            astd = jnp.dot(std, wsT_ref[...], preferred_element_type=jnp.float32)
            astd = jnp.where(astd <= EPS, 1.0, astd)
            inv_std = 1.0 / astd                                         # (Bblk, C)
            # Post-scaling mean derived analytically instead of a third full-tile
            # reduction: mean(y * inv_std, axis=2) == inv_std * (avg - a).
            avg2 = inv_std * (avg - a)
            gate = jax.nn.sigmoid(
                jnp.dot(avg2, wgT_ref[...], preferred_element_type=jnp.float32)
                + bg_ref[...]
            )
            # Single fused apply+store pass over the big tile.
            o_ref[...] = (y * (inv_std * gate)[:, :, None]).astype(o_ref.dtype)
        return kernel

    raise ValueError(f"unknown DAIN mode: {mode!r}")


# ---------------------------------------------------------------------------
# Block sizing
# ---------------------------------------------------------------------------
def _row_bytes(C, T, itemsize):
    # Per batch row per grid step: input + output tiles (each double-buffered by
    # the pipeliner) plus ~2 live full-tile f32 intermediates in the fused
    # kernel (the f32 upcast of x and the centered tile y).
    return (2 * 2 * itemsize + 2 * 4) * C * T


def _choose_bblk(B, C, T, itemsize, tile_budget, num_cores):
    row = max(1, _row_bytes(C, T, itemsize))
    bblk = min(B, max(1, tile_budget // row), 1024)
    # 2-TC chips (v7x): keep >= 2 grid steps per core so each core's
    # double-buffering actually overlaps DMA with compute.  1-TC chips
    # (v5e/v6e): no cap -- the biggest tile that fits wins.
    if num_cores >= 2 and B >= 2 * num_cores:
        bblk = min(bblk, pl.cdiv(B, 2 * num_cores))
    # Batch is neither the lane nor the sublane axis: a multiple of 8 is enough
    # for the (Bblk,C)@(C,C) MXU M dimension; do NOT round to 128.
    if bblk >= 16:
        bblk -= bblk % 8
    return max(1, bblk)


# ---------------------------------------------------------------------------
# Pure-JAX math (reference + graceful fallback for rows too large for VMEM)
# ---------------------------------------------------------------------------
def _dain_jax(x, w_mean, w_scale, w_gate, b_gate, mode):
    x = x.astype(jnp.float32)
    if mode is None:
        return x
    if mode == "avg":
        return x - jnp.mean(x, axis=2, keepdims=True)
    avg = jnp.mean(x, axis=2)
    a = avg @ w_mean.T
    x = x - a[:, :, None]
    if mode == "adaptive_avg":
        return x
    std = jnp.sqrt(jnp.mean(x * x, axis=2) + EPS)
    astd = std @ w_scale.T
    astd = jnp.where(astd <= EPS, 1.0, astd)
    x = x / astd[:, :, None]
    if mode == "adaptive_scale":
        return x
    avg2 = jnp.mean(x, axis=2)
    gate = jax.nn.sigmoid(avg2 @ w_gate.T + b_gate[None, :])
    return x * gate[:, :, None]


def dain_reference(x, w_mean, w_scale, w_gate, b_gate, mode="adaptive_avg"):
    return _dain_jax(x, w_mean, w_scale, w_gate, b_gate, mode)


# ---------------------------------------------------------------------------
# Wrapper
# ---------------------------------------------------------------------------
@functools.partial(jax.jit, static_argnames=("mode",))
def dain_forward(x, w_mean, w_scale, w_gate, b_gate, *, mode="adaptive_avg"):
    if mode is None:
        return x  # identity: skip the kernel entirely (no HBM round-trip)

    B, C, T = x.shape
    vmem_phys, num_cores = _tpu_generation()
    tile_budget = int(vmem_phys * 0.40)   # tiles + in-kernel temps
    limit_cap = int(vmem_phys * 0.80)     # stay well below physical VMEM

    if _row_bytes(C, T, x.dtype.itemsize) > tile_budget:
        # TODO(synk): add a T-tiled two-phase kernel (stats pass with an
        # 'arbitrary' reduction axis + accumulator, then a tiled apply pass) for
        # rows too big for VMEM; fall back to plain XLA instead of spilling.
        return _dain_jax(x, w_mean, w_scale, w_gate, b_gate, mode).astype(x.dtype)

    bblk = _choose_bblk(B, C, T, x.dtype.itemsize, tile_budget, num_cores)
    grid = (pl.cdiv(B, bblk),)

    x_spec = pl.BlockSpec((bblk, C, T), lambda b: (b, 0, 0))
    w_spec = pl.BlockSpec((C, C), lambda b: (0, 0))
    b_spec = pl.BlockSpec((1, C), lambda b: (0, 0))
    out_spec = pl.BlockSpec((bblk, C, T), lambda b: (b, 0, 0))
    # TODO(synk): T stays on lanes; for T not a multiple of 128 the tail stores
    # are masked (vst.msk).  A wrapper-side pad of T (or a channels-last
    # re-layout) would make stores lane-dense but roughly doubles HBM traffic
    # for this memory-bound kernel, so it is not taken here.

    if mode == "avg":
        in_specs, args = [x_spec], (x,)
    elif mode == "adaptive_avg":
        in_specs, args = [x_spec, w_spec], (x, w_mean.T)   # transpose once, outside
    elif mode == "adaptive_scale":
        in_specs, args = [x_spec, w_spec, w_spec], (x, w_mean.T, w_scale.T)
    elif mode == "full":
        in_specs = [x_spec, w_spec, w_spec, w_spec, b_spec]
        args = (x, w_mean.T, w_scale.T, w_gate.T, b_gate.reshape(1, C))
    else:
        raise ValueError(f"unknown DAIN mode: {mode!r}")

    # VMEM limit: double-buffered I/O tiles + fused-kernel f32 temporaries +
    # weights, with headroom, capped per generation.
    need = bblk * _row_bytes(C, T, x.dtype.itemsize) + 2 * (3 * C * C + C) * 4
    vmem_limit = min(limit_cap, max(32 << 20, int(1.25 * need) + (4 << 20)))

    return pl.pallas_call(
        _make_dain_kernel(mode),
        out_shape=jax.ShapeDtypeStruct((B, C, T), x.dtype),
        grid_spec=pltpu.PrefetchScalarGridSpec(
            num_scalar_prefetch=0,
            grid=grid,
            in_specs=in_specs,
            out_specs=out_spec,
        ),
        compiler_params=pltpu.CompilerParams(
            dimension_semantics=("parallel",),
            vmem_limit_bytes=vmem_limit,
        ),
    )(*args)


# ---------------------------------------------------------------------------
# Main
# ---------------------------------------------------------------------------
if __name__ == "__main__":
    B, C, T = 2, 32, 16  # batch, input_dim, seq_len (small shapes)

    key = jax.random.PRNGKey(0)
    kx, kw, kb = jax.random.split(key, 3)

    x = jax.random.normal(kx, (B, C, T), dtype=jnp.float32)

    # Parameters, initialized deterministically as in __init__:
    #   mean_layer / scaling_layer weights = identity (no bias)
    #   gating_layer = Linear(C, C) with uniform init
    w_mean = jnp.eye(C, dtype=jnp.float32)
    w_scale = jnp.eye(C, dtype=jnp.float32)
    bound = 1.0 / jnp.sqrt(jnp.float32(C))
    w_gate = jax.random.uniform(kw, (C, C), jnp.float32, -bound, bound)
    b_gate = jax.random.uniform(kb, (C,), jnp.float32, -bound, bound)

    ok = True
    for mode in ("adaptive_avg", "full", "adaptive_scale", "avg", None):
        out = dain_forward(x, w_mean, w_scale, w_gate, b_gate, mode=mode)
        out = jax.block_until_ready(out)
        ref = dain_reference(x, w_mean, w_scale, w_gate, b_gate, mode=mode)
        if not jnp.allclose(out, ref, atol=1e-5, rtol=1e-5):
            ok = False
            print(f"mode={mode}: MISMATCH, max abs err = "
                  f"{float(jnp.max(jnp.abs(out - ref)))}")

    if ok:
        print("KERNEL_OK")
</pallas_src>

<mosaic_0001>
module attributes {stable_mosaic.version = 11 : i64} {
  func.func @kernel(%arg0: i32, %arg1: memref<2x32x16xf32, #tpu.memory_space<vmem>>, %arg2: memref<32x32xf32, #tpu.memory_space<vmem>>, %arg3: memref<2x32x16xf32, #tpu.memory_space<vmem>>) attributes {dimension_semantics = [#tpu.dimension_semantics<parallel>], iteration_bounds = array<i64: 1>, scalar_prefetch = 0 : i64, scratch_operands = 0 : i64, tpu.core_type = #tpu.core_type<tc>, window_params = [{transform_indices = @transform_0, window_bounds = array<i64: 2, 32, 16>}, {pipeline_mode = #tpu.pipeline_mode<synchronous>, transform_indices = @transform_1, window_bounds = array<i64: 32, 32>}, {transform_indices = @transform_2, window_bounds = array<i64: 2, 32, 16>}]} {
    %c0 = arith.constant 0 : index
    %c0_0 = arith.constant 0 : index
    %c0_1 = arith.constant 0 : index
    %0 = vector.load %arg1[%c0, %c0_0, %c0_1] : memref<2x32x16xf32, #tpu.memory_space<vmem>>, vector<2x32x16xf32>
    %cst = arith.constant dense<0.000000e+00> : vector<2x32xf32>
    %1 = vector.multi_reduction <add>, %0, %cst [2] : vector<2x32x16xf32> to vector<2x32xf32>
    %cst_2 = arith.constant 1.600000e+01 : f32
    %2 = vector.broadcast %cst_2 : f32 to vector<2x32xf32>
    %3 = arith.divf %1, %2 : vector<2x32xf32>
    %c0_3 = arith.constant 0 : index
    %c0_4 = arith.constant 0 : index
    %4 = vector.load %arg2[%c0_3, %c0_4] : memref<32x32xf32, #tpu.memory_space<vmem>>, vector<32x32xf32>
    %cst_5 = arith.constant dense<0.000000e+00> : vector<2x32xf32>
    %5 = tpu.matmul %3, %4, %cst_5 {dimension_numbers = #tpu.dot_dimension_numbers<[1], [0], [0], [1], [0, 0, 1, 1], [], []>} : vector<2x32xf32>, vector<32x32xf32>, vector<2x32xf32> -> vector<2x32xf32>
    %6 = vector.shape_cast %5 : vector<2x32xf32> to vector<2x32x1xf32>
    %7 = vector.broadcast %6 : vector<2x32x1xf32> to vector<2x32x16xf32>
    %8 = arith.subf %0, %7 : vector<2x32x16xf32>
    %c0_6 = arith.constant 0 : index
    %c0_7 = arith.constant 0 : index
    %c0_8 = arith.constant 0 : index
    %9 = vector.load %arg3[%c0_6, %c0_7, %c0_8] : memref<2x32x16xf32, #tpu.memory_space<vmem>>, vector<2x32x16xf32>
    tpu.vector_store %arg3[%c0_6, %c0_7, %c0_8], %8 {strides = array<i32>} : memref<2x32x16xf32, #tpu.memory_space<vmem>>, vector<2x32x16xf32>,
    return
  }
  func.func @transform_0(%arg0: i32) -> (i32, i32, i32) {
    %c0_i32 = arith.constant 0 : i32
    %c0_i32_0 = arith.constant 0 : i32
    %c0_i32_1 = arith.constant 0 : i32
    return %arg0, %c0_i32, %c0_i32_0 : i32, i32, i32
  }
  func.func @transform_1(%arg0: i32) -> (i32, i32) {
    %c0_i32 = arith.constant 0 : i32
    %c0_i32_0 = arith.constant 0 : i32
    %c0_i32_1 = arith.constant 0 : i32
    return %c0_i32, %c0_i32_0 : i32, i32
  }
  func.func @transform_2(%arg0: i32) -> (i32, i32, i32) {
    %c0_i32 = arith.constant 0 : i32
    %c0_i32_0 = arith.constant 0 : i32
    %c0_i32_1 = arith.constant 0 : i32
    return %arg0, %c0_i32, %c0_i32_0 : i32, i32, i32
  }
}

</mosaic_0001>

<llo_original>
// kernel: dain_forward.1
$region0: #{dain_forward.1}
  #allocation0 [shape = 'u32[]', space=smem, size = 0x4, offset = 0x4, fixed_abs, tag = 'smem constant byte address 0x4 - core index']
  #allocation1 [shape = 'u32[72,128]{1,0:T(1,128)}', space=vmem, size = 0x9000, scoped, tag = 'internal scratch']
  %s0 = inlined_call_operand.vmem [shape: f32[2,32,16], index: 0, kind: input, shape index: {}]
  %s1 = inlined_call_operand.vmem [shape: f32[32,32], index: 1, kind: input, shape index: {}]
  %s2 = inlined_call_operand.vmem [shape: f32[2,32,16], index: 2, kind: output, shape index: {}]
  %s3 = sld [smem:[#allocation0]]
  $region18: #{dain_forward.1} parent=0
    _
  %s5 = ssub.s32 1, %s3
  %s6 = scalar_select 0, %s5, %s3
  // Predicated region
  $region2: #{dain_forward.1} parent=0 // pred_check
    _
  $region3: #{dain_forward.1} parent=0 // pred_check_branch
    %8 = sbr.rel (0) target = $region5
  $region4: #{dain_forward.1} parent=0 // pred_region
    _
  $region5: #{dain_forward.1} parent=0 // pred_fallthru
    _
  // Predicated region
  $region6: #{dain_forward.1} parent=0 // pred_check
    _
  $region7: #{dain_forward.1} parent=0 // pred_check_branch
    %10 = sbr.rel (0) target = $region9
  $region8: #{dain_forward.1} parent=0 // pred_region
    _
  $region9: #{dain_forward.1} parent=0 // pred_fallthru
    _
  %v11 = vld [vmem:[%s0] sm:$0xff]
  %v12 = vld [vmem:[%s0 + $0x8] sm:$0xff]
  %v13 = vld [vmem:[%s0 + $0x10] sm:$0xff]
  %v14 = vld [vmem:[%s0 + $0x18] sm:$0xff]
  %v15 = vld [vmem:[%s0 + $0x20] sm:$0xff]
  %v16 = vld [vmem:[%s0 + $0x28] sm:$0xff]
  %v17 = vld [vmem:[%s0 + $0x30] sm:$0xff]
  %v18 = vld [vmem:[%s0 + $0x38] sm:$0xff]
  %vm19 = vcmask 130048
  %v20 = vsel %vm19, %v11, 0.0
  %21 = vadd.xlane.f32.xlu0 %v20
  %v22 = vpop.xlane.xlu0 %21
  %v23 = vsel %vm19, %v12, 0.0
  %24 = vadd.xlane.f32.xlu0 %v23
  %v25 = vpop.xlane.xlu0 %24
  %v26 = vsel %vm19, %v13, 0.0
  %27 = vadd.xlane.f32.xlu0 %v26
  %v28 = vpop.xlane.xlu0 %27
  %v29 = vsel %vm19, %v14, 0.0
  %30 = vadd.xlane.f32.xlu0 %v29
  %v31 = vpop.xlane.xlu0 %30
  %v32 = vsel %vm19, %v15, 0.0
  %33 = vadd.xlane.f32.xlu0 %v32
  %v34 = vpop.xlane.xlu0 %33
  %v35 = vsel %vm19, %v16, 0.0
  %36 = vadd.xlane.f32.xlu0 %v35
  %v37 = vpop.xlane.xlu0 %36
  %v38 = vsel %vm19, %v17, 0.0
  %39 = vadd.xlane.f32.xlu0 %v38
  %v40 = vpop.xlane.xlu0 %39
  %v41 = vsel %vm19, %v18, 0.0
  %42 = vadd.xlane.f32.xlu0 %v41
  %v43 = vpop.xlane.xlu0 %42
  %v44 = vrcp.pop 16.0
  %v45 = vmul.f32 16.0, %v44
  %v46 = vsub.f32 1.0, %v45
  %v47 = vmul.f32 %v44, %v46
  %v48 = vadd.f32 %v44, %v47
  %vm49 = vweird.f32 %v44
  %v50 = vsel %vm49, %v44, %v48
  %v51 = vmul.f32 %v22, %v50
  %v52 = vmul.f32 %v25, %v50
  %v53 = vmul.f32 %v28, %v50
  %v54 = vmul.f32 %v31, %v50
  %v55 = vmul.f32 %v34, %v50
  %v56 = vmul.f32 %v37, %v50
  %v57 = vmul.f32 %v40, %v50
  %v58 = vmul.f32 %v43, %v50
  %v59 = vld [vmem:[%s1] sm:$0xff]
  %v60 = vld [vmem:[%s1 + $0x8] sm:$0xff]
  %v61 = vld [vmem:[%s1 + $0x10] sm:$0xff]
  %v62 = vld [vmem:[%s1 + $0x18] sm:$0xff]
  %v71 = vlaneseq
  %v72 = vand.u32 %v71, 127
  %v73 = vperm.slane %v51, %v72
  %v74 = vadd.s32 %v72, 4294967288
  %v75 = vperm.slane %v52, %v74
  %vm76 = vcmask 130112
  %v77 = vsel %vm76, %v75, %v73
  %v78 = vadd.s32 %v72, 4294967280
  %v79 = vperm.slane %v53, %v78
  %vm80 = vcmask 195712
  %v81 = vsel %vm80, %v79, %v77
  %v82 = vadd.s32 %v72, 4294967272
  %v83 = vperm.slane %v54, %v82
  %vm84 = vcmask 261312
  %v85 = vsel %vm84, %v83, %v81
  %v86 = vperm.slane %v55, %v72
  %v87 = vperm.slane %v56, %v74
  %v88 = vsel %vm76, %v87, %v86
  %v89 = vperm.slane %v57, %v78
  %v90 = vsel %vm80, %v89, %v88
  %v91 = vperm.slane %v58, %v82
  %v92 = vsel %vm84, %v91, %v90
  %vm93 = vcmask 1041409
  %v94 = vsel %vm93, %v92, %v85
  %vm95 = vcmask 261120
  %v96 = vsel %vm95, %v94, 0
  %98 = vmatpush.msra.mxu0 0.0
  %99 = vmatpush.msra.mxu0 0.0
  %100 = vmatpush.msra.mxu0 0.0
  %101 = vmatpush.msra.mxu0 0.0
  %102 = vmatpush.msra.mxu0 0.0
  %103 = vmatpush.msra.mxu0 0.0
  %104 = vmatpush.msra.mxu0 0.0
  %105 = vmatpush.msra.mxu0 0.0
  %106 = vmatpush.msra.mxu0 0.0
  %107 = vmatpush.msra.mxu0 0.0
  %108 = vmatpush.msra.mxu0 0.0
  %109 = vmatpush.msra.mxu0 0.0
  %110 = vmatpush.msra.mxu0 %v62
  %111 = vmatpush.msra.mxu0 %v61
  %112 = vmatpush.msra.mxu0 %v60
  %113 = vmatpush.msra.mxu0 %v59
  %114 = vmatmul.f32.gmra.mxu0 %v96
  %v115 = vpop.f32.mrf.mxu0
  %v116 = vadd.f32 0.0, %v115
  %117 = vdwg.mxu0
  %v118 = vperm.slane %v116, 0
  %v119 = vlaneseq
  %v120 = vshrl.u32 %v119, 7
  %122 = vset.pattern.permute.xlu0 %v120
  %123 = vperm.xlu0 %122, %v118
  %v124 = vpop.permute.xlu0 %123
  %v125 = vlaneseq
  %v126 = vshrl.u32 %v125, 7
  %v127 = vadd.s32 %v126, 8
  %128 = vset.pattern.permute.xlu0 %v127
  %129 = vperm.xlu0 %128, %v118
  %v130 = vpop.permute.xlu0 %129
  %v131 = vlaneseq
  %v132 = vshrl.u32 %v131, 7
  %v133 = vadd.s32 %v132, 16
  %134 = vset.pattern.permute.xlu0 %v133
  %135 = vperm.xlu0 %134, %v118
  %v136 = vpop.permute.xlu0 %135
  %v137 = vlaneseq
  %v138 = vshrl.u32 %v137, 7
  %v139 = vadd.s32 %v138, 24
  %140 = vset.pattern.permute.xlu0 %v139
  %141 = vperm.xlu0 %140, %v118
  %v142 = vpop.permute.xlu0 %141
  %v143 = vperm.slane %v116, 1
  %v144 = vlaneseq
  %v145 = vshrl.u32 %v144, 7
  %147 = vset.pattern.permute.xlu0 %v145
  %148 = vperm.xlu0 %147, %v143
  %v149 = vpop.permute.xlu0 %148
  %v150 = vlaneseq
  %v151 = vshrl.u32 %v150, 7
  %v152 = vadd.s32 %v151, 8
  %153 = vset.pattern.permute.xlu0 %v152
  %154 = vperm.xlu0 %153, %v143
  %v155 = vpop.permute.xlu0 %154
  %v156 = vlaneseq
  %v157 = vshrl.u32 %v156, 7
  %v158 = vadd.s32 %v157, 16
  %159 = vset.pattern.permute.xlu0 %v158
  %160 = vperm.xlu0 %159, %v143
  %v161 = vpop.permute.xlu0 %160
  %v162 = vlaneseq
  %v163 = vshrl.u32 %v162, 7
  %v164 = vadd.s32 %v163, 24
  %165 = vset.pattern.permute.xlu0 %v164
  %166 = vperm.xlu0 %165, %v143
  %v167 = vpop.permute.xlu0 %166
  %v168 = vsub.f32 %v11, %v124
  %v169 = vsub.f32 %v12, %v130
  %v170 = vsub.f32 %v13, %v136
  %v171 = vsub.f32 %v14, %v142
  %v172 = vsub.f32 %v15, %v149
  %v173 = vsub.f32 %v16, %v155
  %v174 = vsub.f32 %v17, %v161
  %v175 = vsub.f32 %v18, %v167
  %176 = vst.msk [vmem:[%s2] sm:$0xff] %vm19, %v168
  %177 = vst.msk [vmem:[%s2 + $0x8] sm:$0xff] %vm19, %v169
  %178 = vst.msk [vmem:[%s2 + $0x10] sm:$0xff] %vm19, %v170
  %179 = vst.msk [vmem:[%s2 + $0x18] sm:$0xff] %vm19, %v171
  %180 = vst.msk [vmem:[%s2 + $0x20] sm:$0xff] %vm19, %v172
  %181 = vst.msk [vmem:[%s2 + $0x28] sm:$0xff] %vm19, %v173
  %182 = vst.msk [vmem:[%s2 + $0x30] sm:$0xff] %vm19, %v174
  %183 = vst.msk [vmem:[%s2 + $0x38] sm:$0xff] %vm19, %v175
  // Predicated region
  $region10: #{dain_forward.1} parent=0 // pred_check
    _
  $region11: #{dain_forward.1} parent=0 // pred_check_branch
    %185 = sbr.rel (0) target = $region13
  $region12: #{dain_forward.1} parent=0 // pred_region
    _
  $region13: #{dain_forward.1} parent=0 // pred_fallthru
    _
  // Predicated region
  $region14: #{dain_forward.1} parent=0 // pred_check
    _
  $region15: #{dain_forward.1} parent=0 // pred_check_branch
    %187 = sbr.rel (0) target = $region17
  $region16: #{dain_forward.1} parent=0 // pred_region
    _
  $region17: #{dain_forward.1} parent=0 // pred_fallthru
    _

</llo_original>
